<compile_context>
chip_gen: v7x
topology: tpu7x:2x2x1
jax: 0.10.0
libtpu: 0.0.40
codegen_flags: <defaults>
</compile_context>

<pallas_src>
import jax
import jax.numpy as jnp
from jax.experimental import pallas as pl
from jax.experimental.pallas import tpu as pltpu


def _logreg_softmax_kernel(x_ref, p_ref, o_ref):
    # x_ref: (N, F_in)       input, native layout
    # p_ref: (F_in+1, F_out) rows 0..F_in-1 = W^T, last row = bias
    # o_ref: (N, F_out)      softmax(x @ W^T + b, dim=0)
    x = x_ref[...]
    p = p_ref[...]
    f_in = x.shape[1]

    # Linear layer on the VPU: unrolled broadcast FMAs over the (tiny, static)
    # F_in axis.  (N,1) * (1,F_out) broadcasts to (N,F_out).
    acc = x[:, 0:1] * p[0:1, :]
    for k in range(1, f_in):
        acc = acc + x[:, k:k + 1] * p[k:k + 1, :]
    z = acc + p[f_in:f_in + 1, :]                # add bias -> (N, F_out)

    # Softmax over dim=0 (the batch axis == sublane axis): exact arithmetic.
    z_max = jnp.max(z, axis=0, keepdims=True)    # XLU sublane reduce
    e = jnp.exp(z - z_max)                       # EUP
    denom = jnp.sum(e, axis=0, keepdims=True)    # XLU sublane reduce
    o_ref[...] = (e / denom).astype(o_ref.dtype) # exact divide


def pack_params(weight, bias, dtype):
    """Pack torch-layout weight (F_out, F_in) and bias (F_out,) into one
    (F_in+1, F_out) operand: rows = W^T, last row = bias.  Done once."""
    f_out = weight.shape[0]
    return jnp.concatenate(
        [jnp.asarray(weight, dtype).T,
         jnp.asarray(bias, dtype).reshape(1, f_out)],
        axis=0,
    )


def logistic_regression_forward(x, params):
    """x: [N, F_in]; params: [F_in+1, F_out] from pack_params."""
    n, _ = x.shape
    f_out = params.shape[1]

    return pl.pallas_call(
        _logreg_softmax_kernel,
        out_shape=jax.ShapeDtypeStruct((n, f_out), x.dtype),
        in_specs=[
            pl.BlockSpec(memory_space=pltpu.MemorySpace.VMEM),
            pl.BlockSpec(memory_space=pltpu.MemorySpace.VMEM),
        ],
        out_specs=pl.BlockSpec(memory_space=pltpu.MemorySpace.VMEM),
    )(x, params)


if __name__ == "__main__":
    key = jax.random.PRNGKey(0)
    kx, kw, kb = jax.random.split(key, 3)

    # Small shapes consistent with the module: Linear(2, 2), batch of 8.
    N, F_IN, F_OUT = 8, 2, 2
    x = jax.random.normal(kx, (N, F_IN), dtype=jnp.float32)

    # Same init family as torch.nn.Linear default: U(-1/sqrt(fan_in), 1/sqrt(fan_in)).
    bound = 1.0 / jnp.sqrt(jnp.float32(F_IN))
    weight = jax.random.uniform(kw, (F_OUT, F_IN), jnp.float32, -bound, bound)
    bias = jax.random.uniform(kb, (F_OUT,), jnp.float32, -bound, bound)

    params = pack_params(weight, bias, x.dtype)   # one-time "module init"
    y = logistic_regression_forward(x, params)
    y = jax.block_until_ready(y)

    # Reference in plain JAX (softmax over dim=0), exact arithmetic.
    z_ref = x @ weight.T + bias
    y_ref = jax.nn.softmax(z_ref, axis=0)
    assert y.shape == (N, F_OUT)
    assert jnp.allclose(y, y_ref, atol=1e-5, rtol=1e-5), "mismatch vs reference"

    print("KERNEL_OK")
</pallas_src>

<mosaic_0001>
module attributes {stable_mosaic.version = 11 : i64} {
  func.func @_logreg_softmax_kernel(%arg0: memref<8x2xf32, #tpu.memory_space<vmem>>, %arg1: memref<3x2xf32, #tpu.memory_space<vmem>>, %arg2: memref<8x2xf32, #tpu.memory_space<vmem>>) attributes {dimension_semantics = [], scalar_prefetch = 0 : i64, scratch_operands = 0 : i64, tpu.core_type = #tpu.core_type<tc>} {
    %c0 = arith.constant 0 : index
    %c0_0 = arith.constant 0 : index
    %0 = vector.load %arg0[%c0, %c0_0] : memref<8x2xf32, #tpu.memory_space<vmem>>, vector<8x2xf32>
    %c0_1 = arith.constant 0 : index
    %c0_2 = arith.constant 0 : index
    %1 = vector.load %arg1[%c0_1, %c0_2] : memref<3x2xf32, #tpu.memory_space<vmem>>, vector<3x2xf32>
    %2 = vector.extract_strided_slice %0 {offsets = [0, 0], sizes = [8, 1], strides = [1, 1]} : vector<8x2xf32> to vector<8x1xf32>
    %3 = vector.extract_strided_slice %1 {offsets = [0, 0], sizes = [1, 2], strides = [1, 1]} : vector<3x2xf32> to vector<1x2xf32>
    %4 = vector.broadcast %2 : vector<8x1xf32> to vector<8x2xf32>
    %5 = vector.broadcast %3 : vector<1x2xf32> to vector<8x2xf32>
    %6 = arith.mulf %4, %5 : vector<8x2xf32>
    %7 = vector.extract_strided_slice %0 {offsets = [0, 1], sizes = [8, 1], strides = [1, 1]} : vector<8x2xf32> to vector<8x1xf32>
    %8 = vector.extract_strided_slice %1 {offsets = [1, 0], sizes = [1, 2], strides = [1, 1]} : vector<3x2xf32> to vector<1x2xf32>
    %9 = vector.broadcast %7 : vector<8x1xf32> to vector<8x2xf32>
    %10 = vector.broadcast %8 : vector<1x2xf32> to vector<8x2xf32>
    %11 = arith.mulf %9, %10 : vector<8x2xf32>
    %12 = arith.addf %6, %11 : vector<8x2xf32>
    %13 = vector.extract_strided_slice %1 {offsets = [2, 0], sizes = [1, 2], strides = [1, 1]} : vector<3x2xf32> to vector<1x2xf32>
    %14 = vector.broadcast %13 : vector<1x2xf32> to vector<8x2xf32>
    %15 = arith.addf %12, %14 : vector<8x2xf32>
    %cst = arith.constant dense<0xFF800000> : vector<2xf32>
    %16 = vector.multi_reduction <maximumf>, %15, %cst [0] : vector<8x2xf32> to vector<2xf32>
    %17 = vector.shape_cast %16 : vector<2xf32> to vector<1x2xf32>
    %18 = vector.broadcast %17 : vector<1x2xf32> to vector<8x2xf32>
    %19 = arith.subf %15, %18 : vector<8x2xf32>
    %20 = math.exp %19 : vector<8x2xf32>
    %cst_3 = arith.constant dense<0.000000e+00> : vector<2xf32>
    %21 = vector.multi_reduction <add>, %20, %cst_3 [0] : vector<8x2xf32> to vector<2xf32>
    %22 = vector.shape_cast %21 : vector<2xf32> to vector<1x2xf32>
    %23 = vector.broadcast %22 : vector<1x2xf32> to vector<8x2xf32>
    %24 = arith.divf %20, %23 : vector<8x2xf32>
    %c0_4 = arith.constant 0 : index
    %c0_5 = arith.constant 0 : index
    %25 = vector.load %arg2[%c0_4, %c0_5] : memref<8x2xf32, #tpu.memory_space<vmem>>, vector<8x2xf32>
    tpu.vector_store %arg2[%c0_4, %c0_5], %24 {strides = array<i32>} : memref<8x2xf32, #tpu.memory_space<vmem>>, vector<8x2xf32>,
    return
  }
}

</mosaic_0001>

<llo_original>
// kernel: tpu_custom_call.1
$region0: #{tpu_custom_call.1}
  #allocation0 [shape = 'u32[]', space=smem, size = 0x4, offset = 0x4, fixed_abs, tag = 'smem constant byte address 0x4 - core index']
  #allocation1 [shape = 'u32[144,128]{1,0:T(1,128)}', space=vmem, size = 0x12000, scoped, tag = 'internal scratch']
  %s0 = inlined_call_operand.vmem [shape: f32[8,2], index: 0, kind: input, shape index: {}]
  %s1 = inlined_call_operand.vmem [shape: f32[3,2], index: 1, kind: input, shape index: {}]
  %s2 = inlined_call_operand.vmem [shape: f32[8,2], index: 2, kind: output, shape index: {}]
  %s3 = sld [smem:[#allocation0]]
  $region18: #{tpu_custom_call.1} parent=0
    _
  %s5 = ssub.s32 1, %s3
  %s6 = scalar_select 0, %s5, %s3
  // Predicated region
  $region2: #{tpu_custom_call.1} parent=0 // pred_check
    _
  $region3: #{tpu_custom_call.1} parent=0 // pred_check_branch
    %8 = sbr.rel (0) target = $region5
  $region4: #{tpu_custom_call.1} parent=0 // pred_region
    _
  $region5: #{tpu_custom_call.1} parent=0 // pred_fallthru
    _
  // Predicated region
  $region6: #{tpu_custom_call.1} parent=0 // pred_check
    _
  $region7: #{tpu_custom_call.1} parent=0 // pred_check_branch
    %10 = sbr.rel (0) target = $region9
  $region8: #{tpu_custom_call.1} parent=0 // pred_region
    _
  $region9: #{tpu_custom_call.1} parent=0 // pred_fallthru
    _
  %v11 = vld [vmem:[%s0] sm:$0xff]
  %v12 = vld [vmem:[%s1] sm:$0x7]
  %14 = vset.pattern.permute.xlu0 0
  %15 = vperm.xlu0 %14, %v11
  %v16 = vpop.permute.xlu0 %15
  %v18 = vlaneseq
  %v19 = vshrl.u32 %v18, 7
  %v20 = vsub.s32 0, %v19
  %v21 = vrot.slane %v12, %v20
  %v22 = vmul.f32 %v16, %v21
  %23 = vset.pattern.permute.xlu0 1
  %24 = vperm.xlu0 %23, %v11
  %v25 = vpop.permute.xlu0 %24
  %v27 = vlaneseq
  %v28 = vshrl.u32 %v27, 7
  %v29 = vsub.s32 1, %v28
  %v30 = vrot.slane %v12, %v29
  %v31 = vmul.f32 %v25, %v30
  %v32 = vadd.f32 %v22, %v31
  %v33 = vlaneseq
  %v34 = vshrl.u32 %v33, 7
  %v35 = vsub.s32 2, %v34
  %v36 = vrot.slane %v12, %v35
  %v37 = vadd.f32 %v32, %v36
  %vm38 = vcmask 15360
  %v39 = vsel %vm38, %v37, -inf
  %v40 = vrot.slane %v39, 4
  %v41 = vmax.f32 %v39, %v40
  %v42 = vrot.slane %v41, 2
  %v43 = vmax.f32 %v41, %v42
  %v44 = vrot.slane %v43, 1
  %v45 = vmax.f32 %v43, %v44
  %v46 = vsub.f32 %v37, %v45
  %v47 = vmul.f32 %v46, 1.442695
  %v48 = vpow.pop %v47
  %v49 = vsel %vm38, %v48, 0.0
  %v50 = vrot.slane %v49, 4
  %v51 = vadd.f32 %v49, %v50
  %v52 = vrot.slane %v51, 2
  %v53 = vadd.f32 %v51, %v52
  %v54 = vrot.slane %v53, 1
  %v55 = vadd.f32 %v53, %v54
  %v56 = vrcp.pop %v55
  %v57 = vmul.f32 %v48, %v56
  %58 = vst.msk [vmem:[%s2] sm:$0xff] %vm38, %v57
  // Predicated region
  $region10: #{tpu_custom_call.1} parent=0 // pred_check
    _
  $region11: #{tpu_custom_call.1} parent=0 // pred_check_branch
    %60 = sbr.rel (0) target = $region13
  $region12: #{tpu_custom_call.1} parent=0 // pred_region
    _
  $region13: #{tpu_custom_call.1} parent=0 // pred_fallthru
    _
  // Predicated region
  $region14: #{tpu_custom_call.1} parent=0 // pred_check
    _
  $region15: #{tpu_custom_call.1} parent=0 // pred_check_branch
    %62 = sbr.rel (0) target = $region17
  $region16: #{tpu_custom_call.1} parent=0 // pred_region
    _
  $region17: #{tpu_custom_call.1} parent=0 // pred_fallthru
    _

</llo_original>
